<compile_context>
chip_gen: v6e
topology: v6e:2x2x1
jax: 0.10.0
libtpu: 0.0.40
codegen_flags: <defaults>
</compile_context>

<pallas_src>
import jax
import jax.numpy as jnp
from jax.experimental import pallas as pl
from jax.experimental.pallas import tpu as pltpu

HIDDEN = 256


def _round_up(x, m):
    return ((x + m - 1) // m) * m


def critic_kernel(state_ref, action_ref, w1s_ref, w1a_ref, b1_ref,
                  w2_ref, b2_ref, w3_ref, b3_ref, o_ref):
    # Layer 1 (fused concat): (TB,S)@(S,256) + (TB,A)@(A,256) + b1 -> ReLU
    s = state_ref[...].astype(jnp.bfloat16)
    a = action_ref[...].astype(jnp.bfloat16)
    h1 = (jnp.dot(s, w1s_ref[...], preferred_element_type=jnp.float32)
          + jnp.dot(a, w1a_ref[...], preferred_element_type=jnp.float32))
    h1 = jnp.maximum(h1 + b1_ref[...], 0.0)              # f32 VPU work

    # Layer 2: (TB,256)@(256,256) + b2 -> ReLU
    h2 = jnp.dot(h1.astype(jnp.bfloat16), w2_ref[...],
                 preferred_element_type=jnp.float32)
    h2 = jnp.maximum(h2 + b2_ref[...], 0.0)

    # Layer 3: N=1 matmul replaced by VPU multiply + XLU reduce.
    w3_row = w3_ref[...].astype(jnp.float32)              # (1, 256)
    q = jnp.sum(h2 * w3_row, axis=-1, keepdims=True)      # (TB, 1)
    o_ref[...] = q + b3_ref[0, 0]                          # scalar bias from SMEM


def critic_forward(state, action, params):
    """Forward pass matching Critic.forward(state, action)."""
    w1s, w1a, b1, w2, b2, w3, b3 = params
    batch, state_dim = state.shape
    action_dim = action.shape[1]
    in_dim = state_dim + action_dim

    # Batch tile: >=8 (sublane multiple), capped at 256; pad batch up to TB.
    tb = 256 if batch > 256 else _round_up(batch, 8)
    padded = _round_up(batch, tb)
    if padded != batch:
        state = jnp.pad(state, ((0, padded - batch), (0, 0)))
        action = jnp.pad(action, ((0, padded - batch), (0, 0)))

    grid = (padded // tb,)

    grid_spec = pltpu.PrefetchScalarGridSpec(
        num_scalar_prefetch=0,
        grid=grid,
        in_specs=[
            pl.BlockSpec((tb, state_dim), lambda i: (i, 0)),        # state
            pl.BlockSpec((tb, action_dim), lambda i: (i, 0)),       # action
            pl.BlockSpec((state_dim, HIDDEN), lambda i: (0, 0)),    # w1_s (bf16)
            pl.BlockSpec((action_dim, HIDDEN), lambda i: (0, 0)),   # w1_a (bf16)
            pl.BlockSpec((1, HIDDEN), lambda i: (0, 0)),            # b1 (f32)
            pl.BlockSpec((HIDDEN, HIDDEN), lambda i: (0, 0)),       # w2 (bf16)
            pl.BlockSpec((1, HIDDEN), lambda i: (0, 0)),            # b2 (f32)
            pl.BlockSpec((1, HIDDEN), lambda i: (0, 0)),            # w3 (bf16)
            pl.BlockSpec((1, 1), lambda i: (0, 0),
                         memory_space=pltpu.SMEM),                  # b3 scalar
        ],
        out_specs=pl.BlockSpec((tb, 1), lambda i: (i, 0)),
    )

    flops = 2 * padded * (in_dim * HIDDEN + HIDDEN * HIDDEN + HIDDEN)
    bytes_accessed = (
        state.size * 4 + action.size * 4 + padded * 4       # activations (f32)
        + (w1s.size + w1a.size + w2.size + w3.size) * 2     # bf16 weights
        + (b1.size + b2.size + b3.size) * 4                 # f32 biases
    )

    out = pl.pallas_call(
        critic_kernel,
        out_shape=jax.ShapeDtypeStruct((padded, 1), jnp.float32),
        grid_spec=grid_spec,
        compiler_params=pltpu.CompilerParams(
            dimension_semantics=("parallel",),
        ),
        cost_estimate=pl.CostEstimate(
            flops=flops, transcendentals=0, bytes_accessed=bytes_accessed),
    )(state, action, w1s, w1a, b1, w2, b2, w3, b3)

    return out[:batch]


def init_params(key, state_dim, action_dim, hidden=HIDDEN):
    """Init mimicking PyTorch nn.Linear (uniform +/- 1/sqrt(fan_in)).

    w1 is generated as a single (state_dim+action_dim, hidden) matrix (so the
    fan-in bound matches the PyTorch module) and then split into the state /
    action halves used by the fused-concat kernel. Weight matrices are stored
    in bf16; biases stay f32.
    """
    in_dim = state_dim + action_dim
    ks = jax.random.split(key, 6)

    def lin(kw, kb, fan_in, fan_out):
        bound = 1.0 / jnp.sqrt(fan_in)
        w = jax.random.uniform(kw, (fan_in, fan_out), jnp.float32, -bound, bound)
        b = jax.random.uniform(kb, (1, fan_out), jnp.float32, -bound, bound)
        return w, b

    w1, b1 = lin(ks[0], ks[1], in_dim, hidden)
    w2, b2 = lin(ks[2], ks[3], hidden, hidden)
    w3, b3 = lin(ks[4], ks[5], hidden, 1)

    w1s = w1[:state_dim].astype(jnp.bfloat16)
    w1a = w1[state_dim:].astype(jnp.bfloat16)
    w2 = w2.astype(jnp.bfloat16)
    w3_row = w3.T.astype(jnp.bfloat16)        # (1, hidden) row for the VPU reduce
    b3_scalar = b3.reshape(1, 1)               # (1, 1) f32 scalar for SMEM
    return (w1s, w1a, b1, w2, b2, w3_row, b3_scalar)


if __name__ == "__main__":
    batch, state_dim, action_dim = 8, 16, 4

    key = jax.random.PRNGKey(0)
    k_state, k_action, k_params = jax.random.split(key, 3)

    state = jax.random.normal(k_state, (batch, state_dim), jnp.float32)
    action = jax.random.normal(k_action, (batch, action_dim), jnp.float32)
    params = init_params(k_params, state_dim, action_dim)

    q = critic_forward(state, action, params)
    q = jax.block_until_ready(q)
    assert q.shape == (batch, 1)

    # Reference check (plain-JAX, mirroring the bf16-weight / f32-accumulate math).
    w1s, w1a, b1, w2, b2, w3_row, b3 = params
    h1 = jnp.maximum(
        jnp.dot(state.astype(jnp.bfloat16), w1s, preferred_element_type=jnp.float32)
        + jnp.dot(action.astype(jnp.bfloat16), w1a, preferred_element_type=jnp.float32)
        + b1, 0.0)
    h2 = jnp.maximum(
        jnp.dot(h1.astype(jnp.bfloat16), w2, preferred_element_type=jnp.float32)
        + b2, 0.0)
    ref = jnp.sum(h2 * w3_row.astype(jnp.float32), axis=-1, keepdims=True) + b3[0, 0]
    assert jnp.allclose(q, ref, atol=1e-3, rtol=1e-3), (
        float(jnp.max(jnp.abs(q - ref))))

    print("KERNEL_OK")
</pallas_src>

<mosaic_0001>
module attributes {stable_mosaic.version = 11 : i64} {
  func.func @critic_kernel(%arg0: i32, %arg1: memref<8x16xf32, #tpu.memory_space<vmem>>, %arg2: memref<8x4xf32, #tpu.memory_space<vmem>>, %arg3: memref<16x256xbf16, #tpu.memory_space<vmem>>, %arg4: memref<4x256xbf16, #tpu.memory_space<vmem>>, %arg5: memref<1x256xf32, #tpu.memory_space<vmem>>, %arg6: memref<256x256xbf16, #tpu.memory_space<vmem>>, %arg7: memref<1x256xf32, #tpu.memory_space<vmem>>, %arg8: memref<1x256xbf16, #tpu.memory_space<vmem>>, %arg9: memref<1x1xf32, #tpu.memory_space<smem>>, %arg10: memref<8x1xf32, #tpu.memory_space<vmem>>) attributes {dimension_semantics = [#tpu.dimension_semantics<parallel>], iteration_bounds = array<i64: 1>, scalar_prefetch = 0 : i64, scratch_operands = 0 : i64, tpu.core_type = #tpu.core_type<tc>, window_params = [{transform_indices = @transform_0, window_bounds = array<i64: 8, 16>}, {transform_indices = @transform_1, window_bounds = array<i64: 8, 4>}, {pipeline_mode = #tpu.pipeline_mode<synchronous>, transform_indices = @transform_2, window_bounds = array<i64: 16, 256>}, {pipeline_mode = #tpu.pipeline_mode<synchronous>, transform_indices = @transform_3, window_bounds = array<i64: 4, 256>}, {pipeline_mode = #tpu.pipeline_mode<synchronous>, transform_indices = @transform_4, window_bounds = array<i64: 1, 256>}, {pipeline_mode = #tpu.pipeline_mode<synchronous>, transform_indices = @transform_5, window_bounds = array<i64: 256, 256>}, {pipeline_mode = #tpu.pipeline_mode<synchronous>, transform_indices = @transform_6, window_bounds = array<i64: 1, 256>}, {pipeline_mode = #tpu.pipeline_mode<synchronous>, transform_indices = @transform_7, window_bounds = array<i64: 1, 256>}, {transform_indices = @transform_8, window_bounds = array<i64: 1, 1>}, {transform_indices = @transform_9, window_bounds = array<i64: 8, 1>}]} {
    %c0 = arith.constant 0 : index
    %c0_0 = arith.constant 0 : index
    %0 = vector.load %arg1[%c0, %c0_0] : memref<8x16xf32, #tpu.memory_space<vmem>>, vector<8x16xf32>
    %1 = arith.truncf %0 : vector<8x16xf32> to vector<8x16xbf16>
    %c0_1 = arith.constant 0 : index
    %c0_2 = arith.constant 0 : index
    %2 = vector.load %arg2[%c0_1, %c0_2] : memref<8x4xf32, #tpu.memory_space<vmem>>, vector<8x4xf32>
    %3 = arith.truncf %2 : vector<8x4xf32> to vector<8x4xbf16>
    %c0_3 = arith.constant 0 : index
    %c0_4 = arith.constant 0 : index
    %4 = vector.load %arg3[%c0_3, %c0_4] : memref<16x256xbf16, #tpu.memory_space<vmem>>, vector<16x256xbf16>
    %cst = arith.constant dense<0.000000e+00> : vector<8x256xf32>
    %5 = tpu.matmul %1, %4, %cst {dimension_numbers = #tpu.dot_dimension_numbers<[1], [0], [0], [1], [0, 0, 1, 1], [], []>} : vector<8x16xbf16>, vector<16x256xbf16>, vector<8x256xf32> -> vector<8x256xf32>
    %c0_5 = arith.constant 0 : index
    %c0_6 = arith.constant 0 : index
    %6 = vector.load %arg4[%c0_5, %c0_6] : memref<4x256xbf16, #tpu.memory_space<vmem>>, vector<4x256xbf16>
    %cst_7 = arith.constant dense<0.000000e+00> : vector<8x256xf32>
    %7 = tpu.matmul %3, %6, %cst_7 {dimension_numbers = #tpu.dot_dimension_numbers<[1], [0], [0], [1], [0, 0, 1, 1], [], []>} : vector<8x4xbf16>, vector<4x256xbf16>, vector<8x256xf32> -> vector<8x256xf32>
    %8 = arith.addf %5, %7 : vector<8x256xf32>
    %c0_8 = arith.constant 0 : index
    %c0_9 = arith.constant 0 : index
    %9 = vector.load %arg5[%c0_8, %c0_9] : memref<1x256xf32, #tpu.memory_space<vmem>>, vector<1x256xf32>
    %10 = vector.broadcast %9 : vector<1x256xf32> to vector<8x256xf32>
    %11 = arith.addf %8, %10 : vector<8x256xf32>
    %cst_10 = arith.constant 0.000000e+00 : f32
    %12 = vector.broadcast %cst_10 : f32 to vector<8x256xf32>
    %13 = arith.maximumf %11, %12 : vector<8x256xf32>
    %14 = arith.truncf %13 : vector<8x256xf32> to vector<8x256xbf16>
    %c0_11 = arith.constant 0 : index
    %c0_12 = arith.constant 0 : index
    %15 = vector.load %arg6[%c0_11, %c0_12] : memref<256x256xbf16, #tpu.memory_space<vmem>>, vector<256x256xbf16>
    %cst_13 = arith.constant dense<0.000000e+00> : vector<8x256xf32>
    %16 = tpu.matmul %14, %15, %cst_13 {dimension_numbers = #tpu.dot_dimension_numbers<[1], [0], [0], [1], [0, 0, 1, 1], [], []>} : vector<8x256xbf16>, vector<256x256xbf16>, vector<8x256xf32> -> vector<8x256xf32>
    %c0_14 = arith.constant 0 : index
    %c0_15 = arith.constant 0 : index
    %17 = vector.load %arg7[%c0_14, %c0_15] : memref<1x256xf32, #tpu.memory_space<vmem>>, vector<1x256xf32>
    %18 = vector.broadcast %17 : vector<1x256xf32> to vector<8x256xf32>
    %19 = arith.addf %16, %18 : vector<8x256xf32>
    %cst_16 = arith.constant 0.000000e+00 : f32
    %20 = vector.broadcast %cst_16 : f32 to vector<8x256xf32>
    %21 = arith.maximumf %19, %20 : vector<8x256xf32>
    %c0_17 = arith.constant 0 : index
    %c0_18 = arith.constant 0 : index
    %22 = vector.load %arg8[%c0_17, %c0_18] : memref<1x256xbf16, #tpu.memory_space<vmem>>, vector<1x256xbf16>
    %23 = arith.extf %22 : vector<1x256xbf16> to vector<1x256xf32>
    %24 = vector.broadcast %23 : vector<1x256xf32> to vector<8x256xf32>
    %25 = arith.mulf %21, %24 : vector<8x256xf32>
    %cst_19 = arith.constant dense<0.000000e+00> : vector<8xf32>
    %26 = vector.multi_reduction <add>, %25, %cst_19 [1] : vector<8x256xf32> to vector<8xf32>
    %27 = vector.shape_cast %26 : vector<8xf32> to vector<8x1xf32>
    %c0_20 = arith.constant 0 : index
    %c0_21 = arith.constant 0 : index
    %28 = memref.load %arg9[%c0_20, %c0_21] : memref<1x1xf32, #tpu.memory_space<smem>>
    %29 = vector.broadcast %28 : f32 to vector<8x1xf32>
    %30 = arith.addf %27, %29 : vector<8x1xf32>
    %c0_22 = arith.constant 0 : index
    %c0_23 = arith.constant 0 : index
    %31 = vector.load %arg10[%c0_22, %c0_23] : memref<8x1xf32, #tpu.memory_space<vmem>>, vector<8x1xf32>
    tpu.vector_store %arg10[%c0_22, %c0_23], %30 {strides = array<i32>} : memref<8x1xf32, #tpu.memory_space<vmem>>, vector<8x1xf32>,
    return
  }
  func.func @transform_0(%arg0: i32) -> (i32, i32) {
    %c0_i32 = arith.constant 0 : i32
    %c0_i32_0 = arith.constant 0 : i32
    return %arg0, %c0_i32 : i32, i32
  }
  func.func @transform_1(%arg0: i32) -> (i32, i32) {
    %c0_i32 = arith.constant 0 : i32
    %c0_i32_0 = arith.constant 0 : i32
    return %arg0, %c0_i32 : i32, i32
  }
  func.func @transform_2(%arg0: i32) -> (i32, i32) {
    %c0_i32 = arith.constant 0 : i32
    %c0_i32_0 = arith.constant 0 : i32
    %c0_i32_1 = arith.constant 0 : i32
    return %c0_i32, %c0_i32_0 : i32, i32
  }
  func.func @transform_3(%arg0: i32) -> (i32, i32) {
    %c0_i32 = arith.constant 0 : i32
    %c0_i32_0 = arith.constant 0 : i32
    %c0_i32_1 = arith.constant 0 : i32
    return %c0_i32, %c0_i32_0 : i32, i32
  }
  func.func @transform_4(%arg0: i32) -> (i32, i32) {
    %c0_i32 = arith.constant 0 : i32
    %c0_i32_0 = arith.constant 0 : i32
    %c0_i32_1 = arith.constant 0 : i32
    return %c0_i32, %c0_i32_0 : i32, i32
  }
  func.func @transform_5(%arg0: i32) -> (i32, i32) {
    %c0_i32 = arith.constant 0 : i32
    %c0_i32_0 = arith.constant 0 : i32
    %c0_i32_1 = arith.constant 0 : i32
    return %c0_i32, %c0_i32_0 : i32, i32
  }
  func.func @transform_6(%arg0: i32) -> (i32, i32) {
    %c0_i32 = arith.constant 0 : i32
    %c0_i32_0 = arith.constant 0 : i32
    %c0_i32_1 = arith.constant 0 : i32
    return %c0_i32, %c0_i32_0 : i32, i32
  }
  func.func @transform_7(%arg0: i32) -> (i32, i32) {
    %c0_i32 = arith.constant 0 : i32
    %c0_i32_0 = arith.constant 0 : i32
    %c0_i32_1 = arith.constant 0 : i32
    return %c0_i32, %c0_i32_0 : i32, i32
  }
  func.func @transform_8(%arg0: i32) -> (i32, i32) {
    %c0_i32 = arith.constant 0 : i32
    %c0_i32_0 = arith.constant 0 : i32
    %c0_i32_1 = arith.constant 0 : i32
    return %c0_i32, %c0_i32_0 : i32, i32
  }
  func.func @transform_9(%arg0: i32) -> (i32, i32) {
    %c0_i32 = arith.constant 0 : i32
    %c0_i32_0 = arith.constant 0 : i32
    return %arg0, %c0_i32 : i32, i32
  }
}

</mosaic_0001>

<llo_original>
// kernel: tpu_custom_call.1
$region0: #{tpu_custom_call.1}
  #allocation0 [shape = 'u32[]', space=smem, size = 0x4, offset = 0x4, fixed_abs, tag = 'smem constant byte address 0x4 - core index']
  #allocation1 [shape = 'u32[144,128]{1,0:T(1,128)}', space=vmem, size = 0x12000, scoped, tag = 'internal scratch']
  #allocation2 [shape = 'f32[1,1]{1,0:T(1,128)S(6)}', space=smem, size = 0x200, scoped, tag = 'scoped memory for tpu_custom_call.1']
  %s0 = inlined_call_operand.hbm [shape: f32[8,16], index: 0, kind: input, shape index: {}]
  %s1 = inlined_call_operand.vmem [shape: f32[8,4], index: 1, kind: input, shape index: {}]
  %s2 = inlined_call_operand.vmem [shape: bf16[16,256], index: 2, kind: input, shape index: {}]
  %s3 = inlined_call_operand.hbm [shape: bf16[4,256], index: 3, kind: input, shape index: {}]
  %s4 = inlined_call_operand.vmem [shape: f32[1,256], index: 4, kind: input, shape index: {}]
  %s5 = inlined_call_operand.hbm [shape: bf16[256,256], index: 5, kind: input, shape index: {}]
  %s6 = inlined_call_operand.vmem [shape: f32[1,256], index: 6, kind: input, shape index: {}]
  %s7 = inlined_call_operand.vmem [shape: bf16[1,256], index: 7, kind: input, shape index: {}]
  %s8 = inlined_call_operand.<no memory space> [shape: f32[1,1], index: 8, kind: input, shape index: {}]
  %s9 = inlined_call_operand.vmem [shape: f32[8,1], index: 9, kind: output, shape index: {}]
  %s10 = sld [smem:[#allocation0]]
  $region58: #{tpu_custom_call.1} parent=0
    _
  %s12 = ssub.s32 1, %s10
  %s13 = scalar_select 0, %s12, %s10
  %14 = sst [smem:[#allocation2]] %s8
  $region1: #{tpu_custom_call.1} parent=0
    #allocation3 [shape = 'u8[4096]{0}', space=vmem, size = 0x1000, scoped, tag = 'input window, operand 0, single buffered']
    #allocation4 [shape = 's32[1]{0}', space=sflag, size = 0x4, scoped, tag = 'scoped memory for tpu_custom_call.1']
    #allocation5 [shape = 'u8[2048]{0}', space=vmem, size = 0x800, scoped, tag = 'input window, operand 3, single buffered']
    #allocation6 [shape = 's32[1]{0}', space=sflag, size = 0x4, scoped, tag = 'scoped memory for tpu_custom_call.1']
    #allocation7 [shape = 'u8[131072]{0}', space=vmem, size = 0x20000, scoped, tag = 'input window, operand 5, single buffered']
    %15 = vsyncpa [#allocation4], 0
    %16 = vsyncpa [#allocation6], 0
    // Predicated region
    $region2: #{tpu_custom_call.1} parent=1 // pred_check
      _
    $region3: #{tpu_custom_call.1} parent=1 // pred_check_branch
      %18 = sbr.rel (0) target = $region5
    $region4: #{tpu_custom_call.1} parent=1 // pred_region
      %s20 = ssub.s32 128, 128
      %21 = vsyncadd [#allocation4], %s20
      %s23 = sshll.u32 [#allocation3], 4
      %s24 = int_to_ptr.vmem [resolvable:$true] %s23
      %26 = dma.hbm_to_vmem [thread:$0]  %s0, 128, %s24, [#allocation4]
    $region5: #{tpu_custom_call.1} parent=1 // pred_fallthru
      _
    // Predicated region
    $region6: #{tpu_custom_call.1} parent=1 // pred_check
      _
    $region7: #{tpu_custom_call.1} parent=1 // pred_check_branch
      %28 = sbr.rel (0) target = $region9
    $region8: #{tpu_custom_call.1} parent=1 // pred_region
      _
    $region9: #{tpu_custom_call.1} parent=1 // pred_fallthru
      _
    // Predicated region
    $region10: #{tpu_custom_call.1} parent=1 // pred_check
      _
    $region11: #{tpu_custom_call.1} parent=1 // pred_check_branch
      %30 = sbr.rel (0) target = $region13
    $region12: #{tpu_custom_call.1} parent=1 // pred_region
      _
    $region13: #{tpu_custom_call.1} parent=1 // pred_fallthru
      _
    // Predicated region
    $region14: #{tpu_custom_call.1} parent=1 // pred_check
      _
    $region15: #{tpu_custom_call.1} parent=1 // pred_check_branch
      %32 = sbr.rel (0) target = $region17
    $region16: #{tpu_custom_call.1} parent=1 // pred_region
      %s34 = ssub.s32 64, 64
      %35 = vsyncadd [#allocation6], %s34
      %s37 = sshll.u32 [#allocation5], 4
      %s38 = int_to_ptr.vmem [resolvable:$true] %s37
      %40 = dma.hbm_to_vmem [thread:$0]  %s3, 64, %s38, [#allocation6]
    $region17: #{tpu_custom_call.1} parent=1 // pred_fallthru
      _
    // Predicated region
    $region18: #{tpu_custom_call.1} parent=1 // pred_check
      _
    $region19: #{tpu_custom_call.1} parent=1 // pred_check_branch
      %42 = sbr.rel (0) target = $region21
    $region20: #{tpu_custom_call.1} parent=1 // pred_region
      _
    $region21: #{tpu_custom_call.1} parent=1 // pred_fallthru
      _
    // Predicated region
    $region22: #{tpu_custom_call.1} parent=1 // pred_check
      _
    $region23: #{tpu_custom_call.1} parent=1 // pred_check_branch
      %44 = sbr.rel (0) target = $region25
    $region24: #{tpu_custom_call.1} parent=1 // pred_region
      %s46 = ssub.s32 4096, 4096
      %47 = vsyncadd [#allocation6], %s46
      %s48 = sshll.u32 [#allocation7], 4
      %s49 = int_to_ptr.vmem [resolvable:$true] %s48
      %54 = dma.hbm_to_vmem [thread:$0]  %s5, 4096, %s49, [#allocation6], 128, 128, 8
    $region25: #{tpu_custom_call.1} parent=1 // pred_fallthru
      _
    // Predicated region
    $region26: #{tpu_custom_call.1} parent=1 // pred_check
      _
    $region27: #{tpu_custom_call.1} parent=1 // pred_check_branch
      %56 = sbr.rel (0) target = $region29
    $region28: #{tpu_custom_call.1} parent=1 // pred_region
      _
    $region29: #{tpu_custom_call.1} parent=1 // pred_fallthru
      _
    // Predicated region
    $region30: #{tpu_custom_call.1} parent=1 // pred_check
      _
    $region31: #{tpu_custom_call.1} parent=1 // pred_check_branch
      %58 = sbr.rel (0) target = $region33
    $region32: #{tpu_custom_call.1} parent=1 // pred_region
      _
    $region33: #{tpu_custom_call.1} parent=1 // pred_fallthru
      _
    // Predicated region
    $region34: #{tpu_custom_call.1} parent=1 // pred_check
      _
    $region35: #{tpu_custom_call.1} parent=1 // pred_check_branch
      %60 = sbr.rel (0) target = $region37
    $region36: #{tpu_custom_call.1} parent=1 // pred_region
      _
    $region37: #{tpu_custom_call.1} parent=1 // pred_fallthru
      _
    // Predicated region
    $region38: #{tpu_custom_call.1} parent=1 // pred_check
      _
    $region39: #{tpu_custom_call.1} parent=1 // pred_check_branch
      %62 = sbr.rel (0) target = $region41
    $region40: #{tpu_custom_call.1} parent=1 // pred_region
      %63 = dma.done [#allocation4], 128
    $region41: #{tpu_custom_call.1} parent=1 // pred_fallthru
      _
    // Predicated region
    $region42: #{tpu_custom_call.1} parent=1 // pred_check
      _
    $region43: #{tpu_custom_call.1} parent=1 // pred_check_branch
      %65 = sbr.rel (0) target = $region45
    $region44: #{tpu_custom_call.1} parent=1 // pred_region
      %66 = dma.done [#allocation6], 64
    $region45: #{tpu_custom_call.1} parent=1 // pred_fallthru
      _
    // Predicated region
    $region46: #{tpu_custom_call.1} parent=1 // pred_check
      _
    $region47: #{tpu_custom_call.1} parent=1 // pred_check_branch
      %68 = sbr.rel (0) target = $region49
    $region48: #{tpu_custom_call.1} parent=1 // pred_region
      %69 = dma.done [#allocation6], 4096
    $region49: #{tpu_custom_call.1} parent=1 // pred_fallthru
      _
    %v71 = vld [vmem:[#allocation3] sm:$0xff]
    %v72 = vpack.c.bf16 %v71, %v71
    %v73 = vld [vmem:[%s1] sm:$0xff]
    %v74 = vpack.c.bf16 %v73, %v73
    %v75 = vld [vmem:[%s2] sm:$0xff]
    %v76 = vld [vmem:[%s2 + $0x8] sm:$0xff]
    %v77 = vld [vmem:[#allocation5] sm:$0xf]
    %v80 = vunpack.c.l.s4 1983009808
    %v81 = vunpack.c.0.s8 %v80
    %v82 = vlaneseq
    %v83 = vshrl.u32 %v82, 7
    %v84 = vsub.s32 %v81, %v83
    %v85 = vrot.slane %v77, %v84
    %v86 = vcombine.high %v85, %v85
    %vm87 = vcmask 31744
    %v89 = vsel %vm87, %v74, 0
    %vm91 = vcmask 1041408
    %v93 = vsel %vm91, %v85, 0
    %v96 = vsel %vm91, %v86, 0
    %98 = vmatprep.subr.bf16.mxu0 0
    %99 = vmatpush1.bf16.msra.mxu0 0
    %100 = vmatprep.subr.bf16.mxu0 0
    %101 = vmatpush1.bf16.msra.mxu0 0
    %102 = vmatprep.subr.bf16.mxu0 0
    %103 = vmatpush1.bf16.msra.mxu0 0
    %104 = vmatprep.subr.bf16.mxu0 0
    %105 = vmatpush1.bf16.msra.mxu0 0
    %106 = vmatprep.subr.bf16.mxu0 0
    %107 = vmatpush1.bf16.msra.mxu0 0
    %108 = vmatprep.subr.bf16.mxu0 0
    %109 = vmatpush1.bf16.msra.mxu0 0
    %110 = vmatprep.subr.bf16.mxu0 0
    %111 = vmatpush1.bf16.msra.mxu0 0
    %112 = vmatprep.subr.bf16.mxu0 %v96
    %113 = vmatpush1.bf16.msra.mxu0 %v93
    %114 = vmatprep.subr.bf16.mxu0 0
    %115 = vmatpush2.bf16.msra.mxu0 0
    %116 = vmatprep.subr.bf16.mxu0 0
    %117 = vmatpush2.bf16.msra.mxu0 0
    %118 = vmatprep.subr.bf16.mxu0 0
    %119 = vmatpush2.bf16.msra.mxu0 0
    %120 = vmatprep.subr.bf16.mxu0 0
    %121 = vmatpush2.bf16.msra.mxu0 0
    %122 = vmatprep.subr.bf16.mxu0 0
    %123 = vmatpush2.bf16.msra.mxu0 0
    %124 = vmatprep.subr.bf16.mxu0 0
    %125 = vmatpush2.bf16.msra.mxu0 0
    %126 = vmatprep.subr.bf16.mxu0 0
    %127 = vmatpush2.bf16.msra.mxu0 0
    %128 = vmatprep.subr.bf16.mxu0 0
    %129 = vmatpush2.bf16.msra.mxu0 0
    %130 = vmatprep.mubr.bf16.mxu0 0
    %131 = vmatmul.mubr.bf16.gmra.mxu0 %v89
    %v132 = vpop.f32.mrf.mxu0
    %v133 = vadd.f32 0.0, %v132
    %v134 = vpop.f32.mrf.mxu0
    %v135 = vadd.f32 0.0, %v134
    %v136 = vpop.f32.mrf.mxu0
    %v137 = vpop.f32.mrf.mxu0
    %138 = vdwg.mxu0
    %v141 = vunpack.c.l.b16 %v75
    %v142 = vunpack.c.h.b16 %v75
    %v143 = vunpack.c.l.b16 %v76
    %v144 = vunpack.c.h.b16 %v76
    %v145 = vpack.c.b16 %v143, %v141
    %v146 = vpack.c.b16 %v144, %v142
    %vm149 = vcmask 130048
    %v151 = vsel %vm149, %v72, 0
    %153 = vmatprep.subr.bf16.mxu0 0
    %154 = vmatpush1.bf16.msra.mxu0 0
    %155 = vmatprep.subr.bf16.mxu0 0
    %156 = vmatpush1.bf16.msra.mxu0 0
    %157 = vmatprep.subr.bf16.mxu0 0
    %158 = vmatpush1.bf16.msra.mxu0 0
    %159 = vmatprep.subr.bf16.mxu0 0
    %160 = vmatpush1.bf16.msra.mxu0 0
    %161 = vmatprep.subr.bf16.mxu0 0
    %162 = vmatpush1.bf16.msra.mxu0 0
    %163 = vmatprep.subr.bf16.mxu0 0
    %164 = vmatpush1.bf16.msra.mxu0 0
    %165 = vmatprep.subr.bf16.mxu0 0
    %166 = vmatpush1.bf16.msra.mxu0 0
    %167 = vmatprep.subr.bf16.mxu0 %v146
    %168 = vmatpush1.bf16.msra.mxu0 %v145
    %169 = vmatprep.subr.bf16.mxu0 0
    %170 = vmatpush2.bf16.msra.mxu0 0
    %171 = vmatprep.subr.bf16.mxu0 0
    %172 = vmatpush2.bf16.msra.mxu0 0
    %173 = vmatprep.subr.bf16.mxu0 0
    %174 = vmatpush2.bf16.msra.mxu0 0
    %175 = vmatprep.subr.bf16.mxu0 0
    %176 = vmatpush2.bf16.msra.mxu0 0
    %177 = vmatprep.subr.bf16.mxu0 0
    %178 = vmatpush2.bf16.msra.mxu0 0
    %179 = vmatprep.subr.bf16.mxu0 0
    %180 = vmatpush2.bf16.msra.mxu0 0
    %181 = vmatprep.subr.bf16.mxu0 0
    %182 = vmatpush2.bf16.msra.mxu0 0
    %183 = vmatprep.subr.bf16.mxu0 0
    %184 = vmatpush2.bf16.msra.mxu0 0
    %185 = vmatprep.mubr.bf16.mxu0 0
    %186 = vmatmul.mubr.bf16.gmra.mxu0 %v151
    %v187 = vpop.f32.mrf.mxu0
    %v188 = vadd.f32 %v133, %v187
    %v189 = vpop.f32.mrf.mxu0
    %v190 = vadd.f32 %v135, %v189
    %v191 = vpop.f32.mrf.mxu0
    %v192 = vpop.f32.mrf.mxu0
    %193 = vdwg.mxu0
    %v194 = vld [vmem:[%s4] sm:$0x3]
    %v196 = vlaneseq
    %v197 = vshrl.u32 %v196, 7
    %v198 = vsub.s32 0, %v197
    %v199 = vrot.slane %v194, %v198
    %v200 = vlaneseq
    %v201 = vshrl.u32 %v200, 7
    %v202 = vsub.s32 1, %v201
    %v203 = vrot.slane %v194, %v202
    %v206 = vadd.f32 %v188, %v199
    %v207 = vadd.f32 %v190, %v203
    %v208 = vmax.f32 %v206, 0.0
    %v209 = vmax.f32 %v207, 0.0
    %v210 = vpack.c.bf16 %v208, %v208
    %v211 = vpack.c.bf16 %v209, %v209
    %v212 = vld [vmem:[#allocation7] sm:$0xff]
    %v213 = vld [vmem:[#allocation7 + $0x8] sm:$0xff]
    %v214 = vld [vmem:[#allocation7 + $0x10] sm:$0xff]
    %v215 = vld [vmem:[#allocation7 + $0x18] sm:$0xff]
    %v216 = vld [vmem:[#allocation7 + $0x20] sm:$0xff]
    %v217 = vld [vmem:[#allocation7 + $0x28] sm:$0xff]
    %v218 = vld [vmem:[#allocation7 + $0x30] sm:$0xff]
    %v219 = vld [vmem:[#allocation7 + $0x38] sm:$0xff]
    %v220 = vld [vmem:[#allocation7 + $0x40] sm:$0xff]
    %v221 = vld [vmem:[#allocation7 + $0x48] sm:$0xff]
    %v222 = vld [vmem:[#allocation7 + $0x50] sm:$0xff]
    %v223 = vld [vmem:[#allocation7 + $0x58] sm:$0xff]
    %v224 = vld [vmem:[#allocation7 + $0x60] sm:$0xff]
    %v225 = vld [vmem:[#allocation7 + $0x68] sm:$0xff]
    %v226 = vld [vmem:[#allocation7 + $0x70] sm:$0xff]
    %v227 = vld [vmem:[#allocation7 + $0x78] sm:$0xff]
    %v228 = vld [vmem:[#allocation7 + $0x80] sm:$0xff]
    %v229 = vld [vmem:[#allocation7 + $0x88] sm:$0xff]
    %v230 = vld [vmem:[#allocation7 + $0x90] sm:$0xff]
    %v231 = vld [vmem:[#allocation7 + $0x98] sm:$0xff]
    %v232 = vld [vmem:[#allocation7 + $0xa0] sm:$0xff]
    %v233 = vld [vmem:[#allocation7 + $0xa8] sm:$0xff]
    %v234 = vld [vmem:[#allocation7 + $0xb0] sm:$0xff]
    %v235 = vld [vmem:[#allocation7 + $0xb8] sm:$0xff]
    %v236 = vld [vmem:[#allocation7 + $0xc0] sm:$0xff]
    %v237 = vld [vmem:[#allocation7 + $0xc8] sm:$0xff]
    %v238 = vld [vmem:[#allocation7 + $0xd0] sm:$0xff]
    %v239 = vld [vmem:[#allocation7 + $0xd8] sm:$0xff]
    %v240 = vld [vmem:[#allocation7 + $0xe0] sm:$0xff]
    %v241 = vld [vmem:[#allocation7 + $0xe8] sm:$0xff]
    %v242 = vld [vmem:[#allocation7 + $0xf0] sm:$0xff]
    %v243 = vld [vmem:[#allocation7 + $0xf8] sm:$0xff]
    %v244 = vld [vmem:[%s6] sm:$0x3]
    %v246 = vlaneseq
    %v247 = vshrl.u32 %v246, 7
    %v248 = vsub.s32 0, %v247
    %v249 = vrot.slane %v244, %v248
    %v250 = vlaneseq
    %v251 = vshrl.u32 %v250, 7
    %v252 = vsub.s32 1, %v251
    %v253 = vrot.slane %v244, %v252
    %v288 = vunpack.c.l.b16 %v212
    %v289 = vunpack.c.h.b16 %v212
    %v290 = vunpack.c.l.b16 %v213
    %v291 = vunpack.c.h.b16 %v213
    %v292 = vunpack.c.l.b16 %v214
    %v293 = vunpack.c.h.b16 %v214
    %v294 = vunpack.c.l.b16 %v215
    %v295 = vunpack.c.h.b16 %v215
    %v296 = vunpack.c.l.b16 %v216
    %v297 = vunpack.c.h.b16 %v216
    %v298 = vunpack.c.l.b16 %v217
    %v299 = vunpack.c.h.b16 %v217
    %v300 = vunpack.c.l.b16 %v218
    %v301 = vunpack.c.h.b16 %v218
    %v302 = vunpack.c.l.b16 %v219
    %v303 = vunpack.c.h.b16 %v219
    %v304 = vunpack.c.l.b16 %v220
    %v305 = vunpack.c.h.b16 %v220
    %v306 = vunpack.c.l.b16 %v221
    %v307 = vunpack.c.h.b16 %v221
    %v308 = vunpack.c.l.b16 %v222
    %v309 = vunpack.c.h.b16 %v222
    %v310 = vunpack.c.l.b16 %v223
    %v311 = vunpack.c.h.b16 %v223
    %v312 = vunpack.c.l.b16 %v224
    %v313 = vunpack.c.h.b16 %v224
    %v314 = vunpack.c.l.b16 %v225
    %v315 = vunpack.c.h.b16 %v225
    %v316 = vunpack.c.l.b16 %v226
    %v317 = vunpack.c.h.b16 %v226
    %v318 = vunpack.c.l.b16 %v227
    %v319 = vunpack.c.h.b16 %v227
    %v320 = vunpack.c.l.b16 %v228
    %v321 = vunpack.c.h.b16 %v228
    %v322 = vunpack.c.l.b16 %v229
    %v323 = vunpack.c.h.b16 %v229
    %v324 = vunpack.c.l.b16 %v230
    %v325 = vunpack.c.h.b16 %v230
    %v326 = vunpack.c.l.b16 %v231
    %v327 = vunpack.c.h.b16 %v231
    %v328 = vunpack.c.l.b16 %v232
    %v329 = vunpack.c.h.b16 %v232
    %v330 = vunpack.c.l.b16 %v233
    %v331 = vunpack.c.h.b16 %v233
    %v332 = vunpack.c.l.b16 %v234
    %v333 = vunpack.c.h.b16 %v234
    %v334 = vunpack.c.l.b16 %v235
    %v335 = vunpack.c.h.b16 %v235
    %v336 = vunpack.c.l.b16 %v236
    %v337 = vunpack.c.h.b16 %v236
    %v338 = vunpack.c.l.b16 %v237
    %v339 = vunpack.c.h.b16 %v237
    %v340 = vunpack.c.l.b16 %v238
    %v341 = vunpack.c.h.b16 %v238
    %v342 = vunpack.c.l.b16 %v239
    %v343 = vunpack.c.h.b16 %v239
    %v344 = vunpack.c.l.b16 %v240
    %v345 = vunpack.c.h.b16 %v240
    %v346 = vunpack.c.l.b16 %v241
    %v347 = vunpack.c.h.b16 %v241
    %v348 = vunpack.c.l.b16 %v242
    %v349 = vunpack.c.h.b16 %v242
    %v350 = vunpack.c.l.b16 %v243
    %v351 = vunpack.c.h.b16 %v243
    %v352 = vpack.c.b16 %v290, %v288
    %v353 = vpack.c.b16 %v291, %v289
    %v354 = vpack.c.b16 %v294, %v292
    %v355 = vpack.c.b16 %v295, %v293
    %v356 = vpack.c.b16 %v298, %v296
    %v357 = vpack.c.b16 %v299, %v297
    %v358 = vpack.c.b16 %v302, %v300
    %v359 = vpack.c.b16 %v303, %v301
    %v360 = vpack.c.b16 %v306, %v304
    %v361 = vpack.c.b16 %v307, %v305
    %v362 = vpack.c.b16 %v310, %v308
    %v363 = vpack.c.b16 %v311, %v309
    %v364 = vpack.c.b16 %v314, %v312
    %v365 = vpack.c.b16 %v315, %v313
    %v366 = vpack.c.b16 %v318, %v316
    %v367 = vpack.c.b16 %v319, %v317
    %v368 = vpack.c.b16 %v322, %v320
    %v369 = vpack.c.b16 %v323, %v321
    %v370 = vpack.c.b16 %v326, %v324
    %v371 = vpack.c.b16 %v327, %v325
    %v372 = vpack.c.b16 %v330, %v328
    %v373 = vpack.c.b16 %v331, %v329
    %v374 = vpack.c.b16 %v334, %v332
    %v375 = vpack.c.b16 %v335, %v333
    %v376 = vpack.c.b16 %v338, %v336
    %v377 = vpack.c.b16 %v339, %v337
    %v378 = vpack.c.b16 %v342, %v340
    %v379 = vpack.c.b16 %v343, %v341
    %v380 = vpack.c.b16 %v346, %v344
    %v381 = vpack.c.b16 %v347, %v345
    %v382 = vpack.c.b16 %v350, %v348
    %v383 = vpack.c.b16 %v351, %v349
    %416 = vmatprep.subr.bf16.mxu0 %v367
    %417 = vmatpush1.bf16.msra.mxu0 %v366
    %418 = vmatprep.subr.bf16.mxu0 %v365
    %419 = vmatpush1.bf16.msra.mxu0 %v364
    %420 = vmatprep.subr.bf16.mxu0 %v363
    %421 = vmatpush1.bf16.msra.mxu0 %v362
    %422 = vmatprep.subr.bf16.mxu0 %v361
    %423 = vmatpush1.bf16.msra.mxu0 %v360
    %424 = vmatprep.subr.bf16.mxu0 %v359
    %425 = vmatpush1.bf16.msra.mxu0 %v358
    %426 = vmatprep.subr.bf16.mxu0 %v357
    %427 = vmatpush1.bf16.msra.mxu0 %v356
    %428 = vmatprep.subr.bf16.mxu0 %v355
    %429 = vmatpush1.bf16.msra.mxu0 %v354
    %430 = vmatprep.subr.bf16.mxu0 %v353
    %431 = vmatpush1.bf16.msra.mxu0 %v352
    %432 = vmatprep.subr.bf16.mxu0 %v383
    %433 = vmatpush2.bf16.msra.mxu0 %v382
    %434 = vmatprep.subr.bf16.mxu0 %v381
    %435 = vmatpush2.bf16.msra.mxu0 %v380
    %436 = vmatprep.subr.bf16.mxu0 %v379
    %437 = vmatpush2.bf16.msra.mxu0 %v378
    %438 = vmatprep.subr.bf16.mxu0 %v377
    %439 = vmatpush2.bf16.msra.mxu0 %v376
    %440 = vmatprep.subr.bf16.mxu0 %v375
    %441 = vmatpush2.bf16.msra.mxu0 %v374
    %442 = vmatprep.subr.bf16.mxu0 %v373
    %443 = vmatpush2.bf16.msra.mxu0 %v372
    %444 = vmatprep.subr.bf16.mxu0 %v371
    %445 = vmatpush2.bf16.msra.mxu0 %v370
    %446 = vmatprep.subr.bf16.mxu0 %v369
    %447 = vmatpush2.bf16.msra.mxu0 %v368
    %448 = vmatprep.mubr.bf16.mxu0 %v211
    %449 = vmatmul.mubr.bf16.gmra.mxu0 %v210
    %v450 = vpop.f32.mrf.mxu0
    %v451 = vadd.f32 %v249, %v450
    %v452 = vpop.f32.mrf.mxu0
    %v453 = vadd.f32 %v253, %v452
    %v454 = vpop.f32.mrf.mxu0
    %v455 = vpop.f32.mrf.mxu0
    %456 = vdwg.mxu0
    %v457 = vmax.f32 %v451, 0.0
    %v458 = vmax.f32 %v453, 0.0
    %v459 = vld [vmem:[%s7] sm:$0x3]
    %v460 = vunpack.c.l.bf16 %v459
    %v462 = vlaneseq
    %v463 = vshrl.u32 %v462, 7
    %v464 = vsub.s32 0, %v463
    %v465 = vrot.slane %v460, %v464
    %v466 = vlaneseq
    %v467 = vshrl.u32 %v466, 7
    %v468 = vsub.s32 2, %v467
    %v469 = vrot.slane %v460, %v468
    %v472 = vlaneseq
    %v473 = vshrl.u32 %v472, 7
    %v474 = vsub.s32 0, %v473
    %v475 = vrot.slane %v465, %v474
    %v476 = vlaneseq
    %v477 = vshrl.u32 %v476, 7
    %v478 = vsub.s32 0, %v477
    %v479 = vrot.slane %v469, %v478
    %v480 = vmul.f32 %v457, %v475
    %v481 = vmul.f32 %v458, %v479
    %v482 = vadd.f32 %v480, %v481
    %483 = vadd.xlane.f32.xlu0 %v482
    %v484 = vpop.xlane.xlu0 %483
    %s485 = sld [smem:[#allocation2]]
    %v486 = vstv %s485
    %v487 = vadd.f32 %v484, %v486
    %vm488 = vcmask 7168
    %489 = vst.msk [vmem:[%s9] sm:$0xff] %vm488, %v487
    // Predicated region
    $region50: #{tpu_custom_call.1} parent=1 // pred_check
      _
    $region51: #{tpu_custom_call.1} parent=1 // pred_check_branch
      %491 = sbr.rel (0) target = $region53
    $region52: #{tpu_custom_call.1} parent=1 // pred_region
      _
    $region53: #{tpu_custom_call.1} parent=1 // pred_fallthru
      _
    // Predicated region
    $region54: #{tpu_custom_call.1} parent=1 // pred_check
      _
    $region55: #{tpu_custom_call.1} parent=1 // pred_check_branch
      %493 = sbr.rel (0) target = $region57
    $region56: #{tpu_custom_call.1} parent=1 // pred_region
      _
    $region57: #{tpu_custom_call.1} parent=1 // pred_fallthru
      _
    %494 = vsyncpa [#allocation4], 1
    %495 = vsyncpa [#allocation6], 1

</llo_original>
